<compile_context>
chip_gen: v7x
topology: tpu7x:2x2x1
jax: 0.10.0
libtpu: 0.0.40
codegen_flags: <defaults>
</compile_context>

<pallas_src>
import functools

import jax
import jax.numpy as jnp
from jax.experimental import pallas as pl
from jax.experimental.pallas import tpu as pltpu


def _ls_ce_kernel(x_ref, t_ref, out_ref, *, smoothing):
    # x_ref:  (TM, C) logits tile (native dtype)
    # t_ref:  (TM, 1) int32 targets tile
    # out_ref:(TM, 1) float32 per-row loss tile
    x_nat = x_ref[...]                                   # (TM, C), native dtype
    tm, c = x_nat.shape

    # One-hot gather of x[row, target[row]] (no dynamic gather on TPU).
    # Select + reduce in the NATIVE dtype: exact, since each row has exactly one
    # nonzero term.  (Further v6e/v7x micro-opt: packed int16 iota/compare.)
    col_ids = jax.lax.broadcasted_iota(jnp.int32, (tm, c), 1)
    tgt = t_ref[...]                                     # (TM, 1) int32
    picked = jnp.sum(
        jnp.where(col_ids == tgt, x_nat, 0),
        axis=-1, keepdims=True).astype(jnp.float32)      # (TM, 1)

    # Row max in native dtype (exact), widened to f32.
    m = jnp.max(x_nat, axis=-1, keepdims=True).astype(jnp.float32)   # (TM, 1)

    # Row sum with f32 accumulation, without materializing an f32 copy of the tile.
    s = jnp.sum(x_nat, axis=-1, keepdims=True, dtype=jnp.float32)    # (TM, 1)

    # Numerically-stable log-sum-exp; the exp argument is the only transient
    # full-width f32 temporary.
    sum_exp = jnp.sum(jnp.exp(x_nat.astype(jnp.float32) - m),
                      axis=-1, keepdims=True)                         # (TM, 1)
    lse = m + jnp.log(sum_exp)                                        # (TM, 1)

    confidence = jnp.float32(1.0 - smoothing)
    # loss = confidence*(lse - picked) + smoothing*(lse - s/C)
    #      = lse - confidence*picked - smoothing*(s/C)    (confidence+smoothing == 1)
    out_ref[...] = (lse
                    - confidence * picked
                    - jnp.float32(smoothing) * (s * (1.0 / jnp.float32(c))))


def _sublane_multiple(dtype):
    """Minimum sublane tiling multiple for the given element width."""
    return {4: 8, 2: 16, 1: 32}.get(jnp.dtype(dtype).itemsize, 8)


def _vmem_budgets():
    """(tile_budget_bytes, vmem_limit_bytes), generation-aware."""
    try:
        cap = pltpu.get_tpu_info().vmem_capacity_bytes
    except Exception:
        cap = 128 << 20
    if cap <= (64 << 20):
        # v7x: 64 MiB physical VMEM per TC, 32 MiB default scoped limit.
        return 20 << 20, 32 << 20
    # v5e / v6e: 128 MiB physical VMEM.
    return 32 << 20, 48 << 20


def _choose_tm(n, c, dtype, tile_budget_bytes):
    """Largest row tile (sublane-rounded) whose pipelined working set fits the budget."""
    sub = _sublane_multiple(dtype)
    in_bytes = jnp.dtype(dtype).itemsize
    # Per-row VMEM:
    #   2 pipeline buffers of the (tm, C) logits tile in native dtype
    # + ~3x C f32 of compiler-materialized intermediates (int32 iota, select temp,
    #   f32 exp argument)
    # + lane-padded (tm, 1) target + output blocks: 2 arrays x 2 buffers x 512 B/row.
    per_row = 2 * c * in_bytes + 3 * c * 4 + 2048
    tm = int(tile_budget_bytes // max(per_row, 1))
    tm = max(sub, min(tm, 2048))
    # Keep >= 2 grid steps so both v7x TensorCores get work (harmless on 1-TC chips).
    half = -(-n // 2)                 # ceil(n / 2)
    half = -(-half // sub) * sub      # round up to sublane multiple
    tm = min(tm, max(half, sub))
    n_pad = -(-n // sub) * sub
    tm = min(tm, n_pad)
    tm = max(sub, (tm // sub) * sub)
    return tm


def label_smoothing_cross_entropy(x, target, smoothing=0.1, tm=None):
    """x: (N, C) logits (any float dtype -- keep bf16 as bf16), target: (N,) int labels.

    Returns the scalar mean label-smoothed cross-entropy loss (float32).
    """
    n, c = x.shape
    tile_budget, vmem_limit = _vmem_budgets()
    if tm is None:
        tm = _choose_tm(n, c, x.dtype, tile_budget)
    t2d = target.astype(jnp.int32).reshape(n, 1)

    kernel = functools.partial(_ls_ce_kernel, smoothing=float(smoothing))
    per_row = pl.pallas_call(
        kernel,
        out_shape=jax.ShapeDtypeStruct((n, 1), jnp.float32),
        grid_spec=pltpu.PrefetchScalarGridSpec(
            num_scalar_prefetch=0,
            grid=(pl.cdiv(n, tm),),
            in_specs=[
                pl.BlockSpec((tm, c), lambda i: (i, 0)),
                pl.BlockSpec((tm, 1), lambda i: (i, 0)),
            ],
            out_specs=pl.BlockSpec((tm, 1), lambda i: (i, 0)),
        ),
        compiler_params=pltpu.CompilerParams(
            dimension_semantics=("parallel",),
            vmem_limit_bytes=vmem_limit,
        ),
    )(x, t2d)  # logits streamed in native dtype; f32 promotion happens in-kernel.
    return jnp.mean(per_row)


def _reference(x, target, smoothing=0.1):
    confidence = 1.0 - smoothing
    logprobs = jax.nn.log_softmax(x.astype(jnp.float32), axis=-1)
    nll = -jnp.take_along_axis(logprobs, target[:, None], axis=-1)[:, 0]
    smooth = -jnp.mean(logprobs, axis=-1)
    return jnp.mean(confidence * nll + smoothing * smooth)


if __name__ == "__main__":
    key = jax.random.PRNGKey(0)
    kx, kt = jax.random.split(key)
    # Small deterministic example; N=20 is intentionally not a multiple of 8 so the
    # ragged last tile and the >=2-step (megacore) grid path are both exercised.
    N, C = 20, 128
    x = jax.random.normal(kx, (N, C), dtype=jnp.float32)
    target = jax.random.randint(kt, (N,), 0, C, dtype=jnp.int32)

    loss = label_smoothing_cross_entropy(x, target, smoothing=0.1)
    loss = jax.block_until_ready(loss)
    ref = _reference(x, target, smoothing=0.1)
    assert jnp.allclose(loss, ref, atol=1e-5, rtol=1e-5), (loss, ref)

    # bf16 logits path (16-row sublane rounding, native-dtype select/max).
    x_bf16 = x.astype(jnp.bfloat16)
    loss_bf16 = label_smoothing_cross_entropy(x_bf16, target, smoothing=0.1)
    loss_bf16 = jax.block_until_ready(loss_bf16)
    ref_bf16 = _reference(x_bf16, target, smoothing=0.1)
    assert jnp.allclose(loss_bf16, ref_bf16, atol=1e-4, rtol=1e-4), (loss_bf16, ref_bf16)

    print("KERNEL_OK")
</pallas_src>

<mosaic_0001>
module attributes {stable_mosaic.version = 11 : i64} {
  func.func @_ls_ce_kernel(%arg0: i32, %arg1: memref<16x128xf32, #tpu.memory_space<vmem>>, %arg2: memref<16x1xi32, #tpu.memory_space<vmem>>, %arg3: memref<16x1xf32, #tpu.memory_space<vmem>>) attributes {dimension_semantics = [#tpu.dimension_semantics<parallel>], iteration_bounds = array<i64: 2>, scalar_prefetch = 0 : i64, scratch_operands = 0 : i64, tpu.core_type = #tpu.core_type<tc>, window_params = [{transform_indices = @transform_0, window_bounds = array<i64: 16, 128>}, {transform_indices = @transform_1, window_bounds = array<i64: 16, 1>}, {transform_indices = @transform_2, window_bounds = array<i64: 16, 1>}]} {
    %c0 = arith.constant 0 : index
    %c0_0 = arith.constant 0 : index
    %0 = vector.load %arg1[%c0, %c0_0] : memref<16x128xf32, #tpu.memory_space<vmem>>, vector<16x128xf32>
    %1 = tpu.iota {dimensions = array<i32: 1>} : vector<16x128xi32>
    %c0_1 = arith.constant 0 : index
    %c0_2 = arith.constant 0 : index
    %2 = vector.load %arg2[%c0_1, %c0_2] : memref<16x1xi32, #tpu.memory_space<vmem>>, vector<16x1xi32>
    %3 = vector.broadcast %2 : vector<16x1xi32> to vector<16x128xi32>
    %4 = arith.cmpi eq, %1, %3 : vector<16x128xi32>
    %c0_i32 = arith.constant 0 : i32
    %5 = arith.sitofp %c0_i32 : i32 to f32
    %6 = vector.broadcast %5 : f32 to vector<16x128xf32>
    %7 = arith.select %4, %0, %6 : vector<16x128xi1>, vector<16x128xf32>
    %cst = arith.constant dense<0.000000e+00> : vector<16xf32>
    %8 = vector.multi_reduction <add>, %7, %cst [1] : vector<16x128xf32> to vector<16xf32>
    %9 = vector.shape_cast %8 : vector<16xf32> to vector<16x1xf32>
    %cst_3 = arith.constant dense<0xFF800000> : vector<16xf32>
    %10 = vector.multi_reduction <maximumf>, %0, %cst_3 [1] : vector<16x128xf32> to vector<16xf32>
    %11 = vector.shape_cast %10 : vector<16xf32> to vector<16x1xf32>
    %cst_4 = arith.constant dense<0.000000e+00> : vector<16xf32>
    %12 = vector.multi_reduction <add>, %0, %cst_4 [1] : vector<16x128xf32> to vector<16xf32>
    %13 = vector.shape_cast %12 : vector<16xf32> to vector<16x1xf32>
    %14 = vector.broadcast %11 : vector<16x1xf32> to vector<16x128xf32>
    %15 = arith.subf %0, %14 : vector<16x128xf32>
    %16 = math.exp %15 : vector<16x128xf32>
    %cst_5 = arith.constant dense<0.000000e+00> : vector<16xf32>
    %17 = vector.multi_reduction <add>, %16, %cst_5 [1] : vector<16x128xf32> to vector<16xf32>
    %18 = vector.shape_cast %17 : vector<16xf32> to vector<16x1xf32>
    %19 = math.log %18 : vector<16x1xf32>
    %20 = arith.addf %11, %19 : vector<16x1xf32>
    %cst_6 = arith.constant 0.899999976 : f32
    %21 = vector.broadcast %cst_6 : f32 to vector<16x1xf32>
    %22 = arith.mulf %21, %9 : vector<16x1xf32>
    %23 = arith.subf %20, %22 : vector<16x1xf32>
    %cst_7 = arith.constant 1.000000e+00 : f32
    %cst_8 = arith.constant 1.280000e+02 : f32
    %24 = arith.divf %cst_7, %cst_8 : f32
    %25 = vector.broadcast %24 : f32 to vector<16x1xf32>
    %26 = arith.mulf %13, %25 : vector<16x1xf32>
    %cst_9 = arith.constant 1.000000e-01 : f32
    %27 = vector.broadcast %cst_9 : f32 to vector<16x1xf32>
    %28 = arith.mulf %27, %26 : vector<16x1xf32>
    %29 = arith.subf %23, %28 : vector<16x1xf32>
    %c0_10 = arith.constant 0 : index
    %c0_11 = arith.constant 0 : index
    %30 = vector.load %arg3[%c0_10, %c0_11] : memref<16x1xf32, #tpu.memory_space<vmem>>, vector<16x1xf32>
    tpu.vector_store %arg3[%c0_10, %c0_11], %29 {strides = array<i32>} : memref<16x1xf32, #tpu.memory_space<vmem>>, vector<16x1xf32>,
    return
  }
  func.func @transform_0(%arg0: i32) -> (i32, i32) {
    %c0_i32 = arith.constant 0 : i32
    %c0_i32_0 = arith.constant 0 : i32
    return %arg0, %c0_i32 : i32, i32
  }
  func.func @transform_1(%arg0: i32) -> (i32, i32) {
    %c0_i32 = arith.constant 0 : i32
    %c0_i32_0 = arith.constant 0 : i32
    return %arg0, %c0_i32 : i32, i32
  }
  func.func @transform_2(%arg0: i32) -> (i32, i32) {
    %c0_i32 = arith.constant 0 : i32
    %c0_i32_0 = arith.constant 0 : i32
    return %arg0, %c0_i32 : i32, i32
  }
}

</mosaic_0001>

<llo_original>
// kernel: tpu_custom_call.1
$region0: #{tpu_custom_call.1}
  #allocation0 [shape = 'u32[]', space=smem, size = 0x4, offset = 0x4, fixed_abs, tag = 'smem constant byte address 0x4 - core index']
  #allocation1 [shape = 'u32[144,128]{1,0:T(1,128)}', space=vmem, size = 0x12000, scoped, tag = 'internal scratch']
  %s0 = inlined_call_operand.vmem [shape: f32[20,128], index: 0, kind: input, shape index: {}]
  %s1 = inlined_call_operand.vmem [shape: s32[20,1], index: 1, kind: input, shape index: {}]
  %s2 = inlined_call_operand.vmem [shape: f32[20,1], index: 2, kind: output, shape index: {}]
  %s3 = sld [smem:[#allocation0]]
  $region89: #{tpu_custom_call.1} parent=0
    _
  %s5 = ssub.s32 1, %s3
  %s6 = scalar_select 0, %s5, %s3
  $region1: #{tpu_custom_call.1} parent=0
    #allocation2 [shape = 'u8[16384]{0}', space=vmem, size = 0x4000, scoped, tag = 'output window, operand 0']
    loop: start=0, step=1, limit=4
    $region2: #{tpu_custom_call.1} parent=1 // loop_pre_header
      _
    $region3: #{tpu_custom_call.1} parent=1 // loop_header
      %s8 = sphi 0, %s12
      %p9 = scmp.ge.s32.totalorder %s8, 4
      %s18 = sphi 0, %s20
      %s21 = sphi 0, %s18
      %s22 = sphi 0, %s21
      %s38 = sphi 0, %s22
      %s44 = sphi 0, %s46
      %s47 = sphi 0, %s44
      %s48 = sphi 0, %s47
      %s64 = sphi 0, %s48
      %s70 = sphi 0, %s72
      %s73 = sphi 0, %s70
      %s74 = sphi 0, %s73
      %s90 = sphi 0, %s74
    $region4: #{tpu_custom_call.1} parent=1 // loop_header_branch
      %11 = sbr.rel (%p9) target = $region8
    $region5: #{tpu_custom_call.1} parent=1 // loop_body
      %s13 = ssub.s32 %s8, 1
      %s14 = ssub.s32 %s8, 2
      %s15 = sadd.s32 %s8, 1
      %s16 = ssub.s32 %s8, %s15
      %p17 = scmp.eq.s32.totalorder %s16, 0
      %s19 = sadd.s32 %s18, 1
      %s20 = scalar_select %p17, %s18, %s19
      %p23 = pneg %p17
      %p24 = scmp.eq.s32.totalorder %s8, 1
      %p25 = por %p23, %p24
      %p26 = scmp.ne.s32.totalorder %s18, %s21
      %p27 = scmp.eq.s32.totalorder %s8, 0
      %p28 = por %p26, %p27
      %p29 = scmp.ne.s32.totalorder %s18, %s21
      %p30 = scmp.eq.s32.totalorder %s13, 1
      %p31 = por %p29, %p30
      %p32 = scmp.ne.s32.totalorder %s21, %s22
      %p33 = scmp.eq.s32.totalorder %s13, 0
      %p34 = por %p32, %p33
      %p35 = scmp.ne.s32.totalorder %s21, %s22
      %p36 = scmp.eq.s32.totalorder %s14, 1
      %p37 = por %p35, %p36
      %p39 = scmp.ne.s32.totalorder %s22, %s38
      %p40 = scmp.eq.s32.totalorder %s14, 0
      %p41 = por %p39, %p40
      %s42 = ssub.s32 %s8, %s15
      %p43 = scmp.eq.s32.totalorder %s42, 0
      %s45 = sadd.s32 %s44, 1
      %s46 = scalar_select %p43, %s44, %s45
      %p49 = pneg %p43
      %p50 = scmp.eq.s32.totalorder %s8, 1
      %p51 = por %p49, %p50
      %p52 = scmp.ne.s32.totalorder %s44, %s47
      %p53 = scmp.eq.s32.totalorder %s8, 0
      %p54 = por %p52, %p53
      %p55 = scmp.ne.s32.totalorder %s44, %s47
      %p56 = scmp.eq.s32.totalorder %s13, 1
      %p57 = por %p55, %p56
      %p58 = scmp.ne.s32.totalorder %s47, %s48
      %p59 = scmp.eq.s32.totalorder %s13, 0
      %p60 = por %p58, %p59
      %p61 = scmp.ne.s32.totalorder %s47, %s48
      %p62 = scmp.eq.s32.totalorder %s14, 1
      %p63 = por %p61, %p62
      %p65 = scmp.ne.s32.totalorder %s48, %s64
      %p66 = scmp.eq.s32.totalorder %s14, 0
      %p67 = por %p65, %p66
      %s68 = ssub.s32 %s8, %s15
      %p69 = scmp.eq.s32.totalorder %s68, 0
      %s71 = sadd.s32 %s70, 1
      %s72 = scalar_select %p69, %s70, %s71
      %p75 = pneg %p69
      %p76 = scmp.eq.s32.totalorder %s8, 1
      %p77 = por %p75, %p76
      %p78 = scmp.ne.s32.totalorder %s70, %s73
      %p79 = scmp.eq.s32.totalorder %s8, 0
      %p80 = por %p78, %p79
      %p81 = scmp.ne.s32.totalorder %s70, %s73
      %p82 = scmp.eq.s32.totalorder %s13, 1
      %p83 = por %p81, %p82
      %p84 = scmp.ne.s32.totalorder %s73, %s74
      %p85 = scmp.eq.s32.totalorder %s13, 0
      %p86 = por %p84, %p85
      %p87 = scmp.ne.s32.totalorder %s73, %s74
      %p88 = scmp.eq.s32.totalorder %s14, 1
      %p89 = por %p87, %p88
      %p91 = scmp.ne.s32.totalorder %s74, %s90
      %p92 = scmp.eq.s32.totalorder %s14, 0
      %p93 = por %p91, %p92
      %p94 = scmp.le.s32.totalorder 1, %s8
      %p95 = scmp.lt.s32.totalorder %s8, 3
      %p96 = pnand %p94, %p95
      %p97 = pneg %p96
      // Predicated region
      $region9: #{tpu_custom_call.1} parent=5 // pred_check
        _
      $region10: #{tpu_custom_call.1} parent=5 // pred_check_branch
        %99 = sbr.rel (%p96) target = $region12
      $region11: #{tpu_custom_call.1} parent=5 // pred_region
        %s100 = ssub.s32 %s8, 1
      $region12: #{tpu_custom_call.1} parent=5 // pred_fallthru
        _
      %p101 = scmp.lt.s32.totalorder %s8, 2
      // Predicated region
      $region13: #{tpu_custom_call.1} parent=5 // pred_check
        %p102 = pneg %p101
      $region14: #{tpu_custom_call.1} parent=5 // pred_check_branch
        %104 = sbr.rel (%p102) target = $region16
      $region15: #{tpu_custom_call.1} parent=5 // pred_region
        // Predicated region
        $region17: #{tpu_custom_call.1} parent=15 // pred_check
          %p105 = pneg %p28
        $region18: #{tpu_custom_call.1} parent=15 // pred_check_branch
          %107 = sbr.rel (%p105) target = $region20
        $region19: #{tpu_custom_call.1} parent=15 // pred_region
          %s108 = smul.u32 2, %s8
          %s109 = ssub.s32 3, %s108
          %p110 = scmp.lt.s32.totalorder %s109, 2
          %s111 = scalar_select %p110, %s109, 2
          %s112 = smul.u32 128, %s111
          %p113 = scmp.lt.s32.totalorder %s108, 2
          %s114 = scalar_select %p113, %s108, 2
          %s115 = smul.addr %s114, 8
          %s116 = scalar_lea.vmem %s0, %s115
          %s117 = smul.u32 2, %s8
          %s118 = ssub.s32 3, %s117
          %p119 = scmp.lt.s32.totalorder %s118, 2
          %s120 = scalar_select %p119, %s118, 2
          %s121 = smul.u32 128, %s120
        $region20: #{tpu_custom_call.1} parent=15 // pred_fallthru
          _
        // Predicated region
        $region21: #{tpu_custom_call.1} parent=15 // pred_check
          %p122 = pneg %p54
        $region22: #{tpu_custom_call.1} parent=15 // pred_check_branch
          %124 = sbr.rel (%p122) target = $region24
        $region23: #{tpu_custom_call.1} parent=15 // pred_region
          %s125 = smul.u32 2, %s8
          %s126 = ssub.s32 3, %s125
          %p127 = scmp.lt.s32.totalorder %s126, 2
          %s128 = scalar_select %p127, %s126, 2
          %s129 = smul.u32 128, %s128
          %p130 = scmp.lt.s32.totalorder %s125, 2
          %s131 = scalar_select %p130, %s125, 2
          %s132 = smul.addr %s131, 8
          %s133 = scalar_lea.vmem %s1, %s132
          %s134 = smul.u32 2, %s8
          %s135 = ssub.s32 3, %s134
          %p136 = scmp.lt.s32.totalorder %s135, 2
          %s137 = scalar_select %p136, %s135, 2
          %s138 = smul.u32 128, %s137
        $region24: #{tpu_custom_call.1} parent=15 // pred_fallthru
          _
      $region16: #{tpu_custom_call.1} parent=5 // pred_fallthru
        _
      %p139 = scmp.le.s32.totalorder 1, %s8
      %p140 = scmp.lt.s32.totalorder %s8, 3
      %p141 = pnand %p139, %p140
      %p142 = pneg %p141
      // Predicated region
      $region25: #{tpu_custom_call.1} parent=5 // pred_check
        _
      $region26: #{tpu_custom_call.1} parent=5 // pred_check_branch
        %144 = sbr.rel (%p141) target = $region28
      $region27: #{tpu_custom_call.1} parent=5 // pred_region
        %s145 = ssub.s32 %s8, 1
        %s146 = smul.u32 2, %s13
        %s147 = ssub.s32 3, %s146
        %p148 = scmp.lt.s32.totalorder %s147, 2
        %s149 = scalar_select %p148, %s147, 2
        %s150 = smul.u32 128, %s149
        %p151 = scmp.lt.s32.totalorder %s146, 2
        %s152 = scalar_select %p151, %s146, 2
        %s153 = smul.addr %s152, 8
        %s154 = scalar_lea.vmem %s0, %s153
        %p155 = pneg %p34
        %p156 = pneg %p31
        %s157 = smul.u32 2, %s13
        %s158 = ssub.s32 3, %s157
        %p159 = scmp.lt.s32.totalorder %s158, 2
        %s160 = scalar_select %p159, %s158, 2
        %s161 = smul.u32 128, %s160
        %p162 = scmp.lt.s32.totalorder %s157, 2
        %s163 = scalar_select %p162, %s157, 2
        %s164 = smul.addr %s163, 8
        %s165 = scalar_lea.vmem %s1, %s164
        %p166 = pneg %p60
        %p167 = pneg %p57
        %p168 = pneg %p86
        %p169 = pneg %p83
        %s170 = sand.u32 %s73, 1
        %s171 = sand.u32 %s73, 1
        %s172 = smul.addr %s171, 16
        %s173 = scalar_lea.vmem [#allocation2], %s172
        %s174 = smul.u32 2, %s13
        %s175 = ssub.s32 3, %s174
        %p176 = scmp.lt.s32.totalorder %s175, 2
        %s177 = scalar_select %p176, %s175, 2
        %s178 = smul.u32 128, %s177
        %p179 = scmp.lt.s32.totalorder %s174, 2
        %s180 = scalar_select %p179, %s174, 2
        %s181 = smul.addr %s180, 8
        %s182 = scalar_lea.vmem %s0, %s181
        %s183 = smul.u32 2, %s13
        %s184 = ssub.s32 3, %s183
        %p185 = scmp.lt.s32.totalorder %s184, 2
        %s186 = scalar_select %p185, %s184, 2
        %s187 = smul.u32 128, %s186
        %s188 = smul.u32 2, %s13
        %s189 = ssub.s32 3, %s188
        %p190 = scmp.lt.s32.totalorder %s189, 2
        %s191 = scalar_select %p190, %s189, 2
        %s192 = smul.u32 128, %s191
        %p193 = scmp.lt.s32.totalorder %s188, 2
        %s194 = scalar_select %p193, %s188, 2
        %s195 = smul.addr %s194, 8
        %s196 = scalar_lea.vmem %s1, %s195
        %s197 = smul.u32 2, %s13
        %s198 = ssub.s32 3, %s197
        %p199 = scmp.lt.s32.totalorder %s198, 2
        %s200 = scalar_select %p199, %s198, 2
        %s201 = smul.u32 128, %s200
        %s202 = smul.u32 2, %s13
        %s203 = ssub.s32 3, %s202
        %p204 = scmp.lt.s32.totalorder %s203, 2
        %s205 = scalar_select %p204, %s203, 2
        %s206 = smul.u32 128, %s205
        %v207 = vld [vmem:[%s182] sm:$0xff]
        %v208 = vld [vmem:[%s182 + $0x8] sm:$0xff]
        %v209 = vlaneseq
        %v210 = vand.u32 %v209, 127
        %v211 = vld [vmem:[%s196] sm:$0xff]
        %v212 = vld [vmem:[%s196 + $0x8] sm:$0xff]
        %213 = vset.pattern.permute.xlu0 0
        %214 = vperm.xlu0 %213, %v211
        %v215 = vpop.permute.xlu0 %214
        %216 = vset.pattern.permute.xlu0 0
        %217 = vperm.xlu0 %216, %v212
        %v218 = vpop.permute.xlu0 %217
        %vm219 = vcmp.eq.s32.totalorder %v210, %v215
        %vm220 = vcmp.eq.s32.totalorder %v210, %v218
        %v221 = vsel %vm219, %v207, 0.0
        %v222 = vsel %vm220, %v208, 0.0
        %223 = vadd.xlane.f32.xlu0 %v221
        %v224 = vpop.xlane.xlu0 %223
        %225 = vadd.xlane.f32.xlu0 %v222
        %v226 = vpop.xlane.xlu0 %225
        %227 = vmax.xlane.f32.xlu0 %v207
        %v228 = vpop.xlane.xlu0 %227
        %229 = vmax.xlane.f32.xlu0 %v208
        %v230 = vpop.xlane.xlu0 %229
        %231 = vadd.xlane.f32.xlu0 %v207
        %v232 = vpop.xlane.xlu0 %231
        %233 = vadd.xlane.f32.xlu0 %v208
        %v234 = vpop.xlane.xlu0 %233
        %v235 = vsub.f32 %v207, %v228
        %v236 = vsub.f32 %v208, %v230
        %v237 = vmul.f32 %v235, 1.442695
        %v238 = vpow.pop %v237
        %v239 = vmul.f32 %v236, 1.442695
        %v240 = vpow.pop %v239
        %241 = vadd.xlane.f32.xlu0 %v238
        %v242 = vpop.xlane.xlu0 %241
        %243 = vadd.xlane.f32.xlu0 %v240
        %v244 = vpop.xlane.xlu0 %243
        %v245 = vlog2.pop %v242
        %v246 = vmul.f32 %v245, 0.6931472
        %v247 = vlog2.pop %v244
        %v248 = vmul.f32 %v247, 0.6931472
        %v249 = vadd.f32 %v228, %v246
        %v250 = vadd.f32 %v230, %v248
        %v251 = vmul.f32 %v224, 0.9
        %v252 = vmul.f32 %v226, 0.9
        %v253 = vsub.f32 %v249, %v251
        %v254 = vsub.f32 %v250, %v252
        %v255 = vmul.f32 %v232, 0.0078125
        %v256 = vmul.f32 %v234, 0.0078125
        %v257 = vmul.f32 %v255, 0.1
        %v258 = vmul.f32 %v256, 0.1
        %v259 = vsub.f32 %v253, %v257
        %v260 = vsub.f32 %v254, %v258
        %vm261 = vcmask 7168
        %262 = vst.msk [vmem:[%s173] sm:$0xff] %vm261, %v259
        %263 = vst.msk [vmem:[%s173 + $0x8] sm:$0xff] %vm261, %v260
        %s264 = sand.u32 %s73, 1
        %s265 = sand.u32 %s73, 1
        %s266 = smul.addr %s265, 16
        %s267 = scalar_lea.vmem [#allocation2], %s266
        // Predicated region
        $region29: #{tpu_custom_call.1} parent=27 // pred_check
          %p268 = pneg %p83
        $region30: #{tpu_custom_call.1} parent=27 // pred_check_branch
          %270 = sbr.rel (%p268) target = $region32
        $region31: #{tpu_custom_call.1} parent=27 // pred_region
          %s271 = smul.u32 2, %s13
          %s272 = ssub.s32 3, %s271
          %p273 = scmp.lt.s32.totalorder %s272, 2
          %s274 = scalar_select %p273, %s272, 2
          %s275 = smul.u32 128, %s274
          %p276 = scmp.ne.s32.totalorder 0, %s275
          %s277 = smul.addr %s271, 8
          %s278 = scalar_lea.vmem %s2, %s277
          // Predicated region
          $region33: #{tpu_custom_call.1} parent=31 // pred_check
            %p279 = pneg %p276
          $region34: #{tpu_custom_call.1} parent=31 // pred_check_branch
            %281 = sbr.rel (%p279) target = $region36
          $region35: #{tpu_custom_call.1} parent=31 // pred_region
            // Predicated region
            $region37: #{tpu_custom_call.1} parent=35 // pred_check
              _
            $region38: #{tpu_custom_call.1} parent=35 // pred_check_branch
              %283 = sbr.rel (0) target = $region40
            $region39: #{tpu_custom_call.1} parent=35 // pred_region
              // Predicated region
              $region59: #{tpu_custom_call.1} parent=39 // pred_check
                _
              $region60: #{tpu_custom_call.1} parent=39 // pred_check_branch
                %334 = sbr.rel (0) target = $region62
              $region61: #{tpu_custom_call.1} parent=39 // pred_region
                %s335 = sshrl.u32 %s274, 1
                // While loop
                $region63: #{tpu_custom_call.1} parent=61 // loop_pre_header
                  _
                $region64: #{tpu_custom_call.1} parent=61 // loop_header
                  %s337 = sphi 0, %s339
                  %p338 = scmp.ge.s32.totalorder %s337, %s335
                  %s342 = sphi 0, %s351
                  %s343 = sphi %s267, %s354
                  %s344 = sphi %s278, %s355
                $region65: #{tpu_custom_call.1} parent=61 // loop_header_branch
                  %341 = sbr.rel (%p338) target = $region69
                $region66: #{tpu_custom_call.1} parent=61 // loop_body
                  %v345 = vld [vmem:[%s343] sm:$0xff]
                  %346 = vst [vmem:[%s344] sm:$0xff] %v345
                  %v347 = vld [vmem:[%s343 + $0x8] sm:$0xff]
                  %348 = vst [vmem:[%s344 + $0x8] sm:$0xff] %v347
                  %s349 = sadd.s32 1, %s342
                  %p350 = scmp.ge.s32.totalorder %s349, %s335
                  %s351 = scalar_select %p350, 0, %s349
                  %s352 = smul.u32 %s351, 16
                  %s353 = smul.u32 %s351, 16
                  %s354 = scalar_lea.vmem %s267, %s352 [#allocation2]
                  %s355 = scalar_lea.vmem %s278, %s353
                $region67: #{tpu_custom_call.1} parent=61 // loop_footer
                  %s339 = sadd.s32 %s337, 1
                $region68: #{tpu_custom_call.1} parent=61 // loop_footer_branch
                  %336 = sbr.rel target = $region64
                $region69: #{tpu_custom_call.1} parent=61 // loop_exit
                  _
                %s356 = sshrl.u32 %s274, 1
                %s357 = sand.u32 %s274, 1
                %s358 = smul.u32 %s356, 2
                %s359 = smul.u32 8, %s358
                %s360 = scalar_lea.vmem %s267, %s359 [#allocation2]
                %s361 = smul.u32 8, %s358
                %s362 = scalar_lea.vmem %s278, %s361
                // While loop
                $region70: #{tpu_custom_call.1} parent=61 // loop_pre_header
                  _
                $region71: #{tpu_custom_call.1} parent=61 // loop_header
                  %s364 = sphi 0, %s366
                  %p365 = scmp.ge.s32.totalorder %s364, %s357
                  %s369 = sphi 0, %s376
                  %s370 = sphi %s360, %s379
                  %s371 = sphi %s362, %s380
                $region72: #{tpu_custom_call.1} parent=61 // loop_header_branch
                  %368 = sbr.rel (%p365) target = $region76
                $region73: #{tpu_custom_call.1} parent=61 // loop_body
                  %v372 = vld [vmem:[%s370] sm:$0xff]
                  %373 = vst [vmem:[%s371] sm:$0xff] %v372
                  %s374 = sadd.s32 1, %s369
                  %p375 = scmp.ge.s32.totalorder %s374, %s357
                  %s376 = scalar_select %p375, 0, %s374
                  %s377 = smul.u32 %s376, 8
                  %s378 = smul.u32 %s376, 8
                  %s379 = scalar_lea.vmem %s360, %s377 [#allocation2]
                  %s380 = scalar_lea.vmem %s362, %s378
                $region74: #{tpu_custom_call.1} parent=61 // loop_footer
                  %s366 = sadd.s32 %s364, 1
                $region75: #{tpu_custom_call.1} parent=61 // loop_footer_branch
                  %363 = sbr.rel target = $region71
                $region76: #{tpu_custom_call.1} parent=61 // loop_exit
                  _
              $region62: #{tpu_custom_call.1} parent=39 // pred_fallthru
                _
              // Predicated region
              $region77: #{tpu_custom_call.1} parent=39 // pred_check
                _
              $region78: #{tpu_custom_call.1} parent=39 // pred_check_branch
                %382 = sbr.rel target = $region80
              $region79: #{tpu_custom_call.1} parent=39 // pred_region
                _
              $region80: #{tpu_custom_call.1} parent=39 // pred_fallthru
                _
            $region40: #{tpu_custom_call.1} parent=35 // pred_fallthru
              _
            // Predicated region
            $region41: #{tpu_custom_call.1} parent=35 // pred_check
              _
            $region42: #{tpu_custom_call.1} parent=35 // pred_check_branch
              %285 = sbr.rel target = $region44
            $region43: #{tpu_custom_call.1} parent=35 // pred_region
              %s287 = sshrl.u32 %s274, 1
              // While loop
              $region45: #{tpu_custom_call.1} parent=43 // loop_pre_header
                _
              $region46: #{tpu_custom_call.1} parent=43 // loop_header
                %s289 = sphi 0, %s291
                %p290 = scmp.ge.s32.totalorder %s289, %s287
                %s294 = sphi 0, %s303
                %s295 = sphi %s267, %s306
                %s296 = sphi %s278, %s307
              $region47: #{tpu_custom_call.1} parent=43 // loop_header_branch
                %293 = sbr.rel (%p290) target = $region51
              $region48: #{tpu_custom_call.1} parent=43 // loop_body
                %v297 = vld [vmem:[%s295] sm:$0xff]
                %298 = vst [vmem:[%s296] sm:$0xff] %v297
                %v299 = vld [vmem:[%s295 + $0x8] sm:$0xff]
                %300 = vst [vmem:[%s296 + $0x8] sm:$0xff] %v299
                %s301 = sadd.s32 1, %s294
                %p302 = scmp.ge.s32.totalorder %s301, %s287
                %s303 = scalar_select %p302, 0, %s301
                %s304 = smul.u32 %s303, 16
                %s305 = smul.u32 %s303, 16
                %s306 = scalar_lea.vmem %s267, %s304 [#allocation2]
                %s307 = scalar_lea.vmem %s278, %s305
              $region49: #{tpu_custom_call.1} parent=43 // loop_footer
                %s291 = sadd.s32 %s289, 1
              $region50: #{tpu_custom_call.1} parent=43 // loop_footer_branch
                %288 = sbr.rel target = $region46
              $region51: #{tpu_custom_call.1} parent=43 // loop_exit
                _
              %s308 = sshrl.u32 %s274, 1
              %s309 = sand.u32 %s274, 1
              %s310 = smul.u32 %s308, 2
              %s311 = smul.u32 8, %s310
              %s312 = scalar_lea.vmem %s267, %s311 [#allocation2]
              %s313 = smul.u32 8, %s310
              %s314 = scalar_lea.vmem %s278, %s313
              // While loop
              $region52: #{tpu_custom_call.1} parent=43 // loop_pre_header
                _
              $region53: #{tpu_custom_call.1} parent=43 // loop_header
                %s316 = sphi 0, %s318
                %p317 = scmp.ge.s32.totalorder %s316, %s309
                %s321 = sphi 0, %s328
                %s322 = sphi %s312, %s331
                %s323 = sphi %s314, %s332
              $region54: #{tpu_custom_call.1} parent=43 // loop_header_branch
                %320 = sbr.rel (%p317) target = $region58
              $region55: #{tpu_custom_call.1} parent=43 // loop_body
                %v324 = vld [vmem:[%s322] sm:$0xff]
                %325 = vst [vmem:[%s323] sm:$0xff] %v324
                %s326 = sadd.s32 1, %s321
                %p327 = scmp.ge.s32.totalorder %s326, %s309
                %s328 = scalar_select %p327, 0, %s326
                %s329 = smul.u32 %s328, 8
                %s330 = smul.u32 %s328, 8
                %s331 = scalar_lea.vmem %s312, %s329 [#allocation2]
                %s332 = scalar_lea.vmem %s314, %s330
              $region56: #{tpu_custom_call.1} parent=43 // loop_footer
                %s318 = sadd.s32 %s316, 1
              $region57: #{tpu_custom_call.1} parent=43 // loop_footer_branch
                %315 = sbr.rel target = $region53
              $region58: #{tpu_custom_call.1} parent=43 // loop_exit
                _
            $region44: #{tpu_custom_call.1} parent=35 // pred_fallthru
              _
          $region36: #{tpu_custom_call.1} parent=31 // pred_fallthru
            _
          %383 = vnop
        $region32: #{tpu_custom_call.1} parent=27 // pred_fallthru
          _
      $region28: #{tpu_custom_call.1} parent=5 // pred_fallthru
        _
      %p384 = scmp.le.s32.totalorder 2, %s8
      // Predicated region
      $region81: #{tpu_custom_call.1} parent=5 // pred_check
        %p385 = pneg %p384
      $region82: #{tpu_custom_call.1} parent=5 // pred_check_branch
        %387 = sbr.rel (%p385) target = $region84
      $region83: #{tpu_custom_call.1} parent=5 // pred_region
        %s388 = ssub.s32 %s8, 2
        // Predicated region
        $region85: #{tpu_custom_call.1} parent=83 // pred_check
          %p389 = pneg %p89
        $region86: #{tpu_custom_call.1} parent=83 // pred_check_branch
          %391 = sbr.rel (%p389) target = $region88
        $region87: #{tpu_custom_call.1} parent=83 // pred_region
          %s392 = sand.u32 %s74, 1
          %s393 = sand.u32 %s74, 1
          %s394 = smul.addr %s393, 16
          %s395 = scalar_lea.vmem [#allocation2], %s394
        $region88: #{tpu_custom_call.1} parent=83 // pred_fallthru
          _
      $region84: #{tpu_custom_call.1} parent=5 // pred_fallthru
        _
    $region6: #{tpu_custom_call.1} parent=1 // loop_footer
      %s12 = sadd.s32 1, %s8
    $region7: #{tpu_custom_call.1} parent=1 // loop_footer_branch
      %7 = sbr.rel target = $region3
    $region8: #{tpu_custom_call.1} parent=1 // loop_exit
      _

</llo_original>
